<compile_context>
chip_gen: v5e
topology: v5e:2x2
jax: 0.10.0
libtpu: 0.0.40
codegen_flags: <defaults>
</compile_context>

<pallas_src>
import numpy as np
import jax
import jax.numpy as jnp
from jax.experimental import pallas as pl
from jax.experimental.pallas import tpu as pltpu


# ---------------------------------------------------------------------------
# Parameter construction (deterministic, mirrors getGaussiankernel(sf, sf // 1.5))
# ---------------------------------------------------------------------------
def _gaussian_taps(sf: int) -> np.ndarray:
    sigma = sf // 1.5  # float floor-division, exactly as in the PyTorch code
    xs = np.arange(-(sf - 1) // 2, (sf - 1) // 2 + 1, dtype=np.float32)
    k = np.exp(-0.5 * np.square(xs / np.float32(sigma)))
    return (k / k.sum()).astype(np.float32)  # (sf,)


def _build_col_matrix(g: np.ndarray, W: int, sf: int) -> np.ndarray:
    """B[j*sf + v, j] = g[v]  ->  (y @ B)[:, j] = sum_v g[v] * y[:, j*sf + v]."""
    Wo = W // sf
    B = np.zeros((W, Wo), np.float32)
    rows = (np.arange(Wo)[:, None] * sf + np.arange(sf)[None, :]).reshape(-1)
    cols = np.repeat(np.arange(Wo), sf)
    B[rows, cols] = np.tile(g, Wo)
    return B


# ---------------------------------------------------------------------------
# Block-size selection (VMEM-budget aware; safe on v5e / v6e / v7x)
# ---------------------------------------------------------------------------
_VMEM_LIMIT_BYTES = 32 * 1024 * 1024       # <= physical VMEM on every generation (v7x: 64 MiB)
_PIPELINE_BUDGET_BYTES = 20 * 1024 * 1024  # headroom below the limit for double-buffering


def _ceil_to(n: int, m: int) -> int:
    return ((n + m - 1) // m) * m


def _choose_rows_per_block(R: int, sf: int, W: int, Wo: int, itemsize: int) -> int:
    """Largest sublane-aligned (multiple-of-8) row count that fits the VMEM budget."""
    # Per-row VMEM cost of the double-buffered blocks, accounting for tile padding:
    # the sf sublane dim pads to 8, the W / Wo lane dims pad to 128.
    in_row = _ceil_to(sf, 8) * _ceil_to(W, 128) * itemsize
    out_row = _ceil_to(Wo, 128) * 4                               # f32 output rows
    b_bytes = 2 * _ceil_to(W, 8) * _ceil_to(Wo, 128) * itemsize   # resident B (x2, conservative)
    per_row = 2 * (in_row + out_row)
    budget = max(_PIPELINE_BUDGET_BYTES - b_bytes, 8 * per_row)
    cap = max(8, (budget // per_row) // 8 * 8)                    # multiple of 8 rows
    if R <= 8:
        return 8                                                  # single (padded) block
    # Keep >= 2 grid steps so both v7x TensorCores get work when R is large enough.
    half = _ceil_to(pl.cdiv(R, 2), 8)
    return int(min(cap, half))


# ---------------------------------------------------------------------------
# Pallas kernel
# ---------------------------------------------------------------------------
def _make_spadown_kernel(g_taps):
    sf = len(g_taps)

    def kernel(x_ref, b_ref, o_ref):
        x = x_ref[...]                                   # (Rb, sf, W)
        # Row (H-axis) Gaussian downsample: exact banded stencil on the VPU
        # (g_taps are Python float scalars, unrolled -> no dense (Ho, H) matmul).
        y = x[:, 0, :] * g_taps[0]                       # (Rb, W)
        for u in range(1, sf):
            y = y + x[:, u, :] * g_taps[u]
        # Column (W-axis) downsample: one wide MXU matmul shared by all rows/channels.
        o = jnp.dot(y, b_ref[...], preferred_element_type=jnp.float32)  # (Rb, Wo)
        o_ref[...] = o.astype(o_ref.dtype)

    return kernel


# ---------------------------------------------------------------------------
# Wrapper
# ---------------------------------------------------------------------------
def spadown_forward(x: jnp.ndarray, sf: int, *, compute_dtype=jnp.float32) -> jnp.ndarray:
    """x: (1, C, H, W) -> (1, C, H//sf, W//sf) float32."""
    N, C, H, W = x.shape
    assert N == 1, "SpaDown's Conv2d(in_channels=1) path requires batch size 1."
    assert H % sf == 0 and W % sf == 0, "H and W must be divisible by sf."
    Ho, Wo = H // sf, W // sf
    R = C * Ho

    g = _gaussian_taps(sf)
    B = jnp.asarray(_build_col_matrix(g, W, sf), dtype=compute_dtype)

    # Free row-major view: xr[c*Ho + i, u, w] == x[0, c, i*sf + u, w]
    xr = x[0].astype(compute_dtype).reshape(R, sf, W)

    itemsize = jnp.dtype(compute_dtype).itemsize
    Rb = _choose_rows_per_block(R, sf, W, Wo, itemsize)
    grid = (pl.cdiv(R, Rb),)

    kernel = _make_spadown_kernel(tuple(float(t) for t in g))

    out_flat = pl.pallas_call(
        kernel,
        out_shape=jax.ShapeDtypeStruct((R, Wo), jnp.float32),
        grid_spec=pltpu.PrefetchScalarGridSpec(
            num_scalar_prefetch=0,
            grid=grid,
            in_specs=[
                # TODO(synk): sweep pipeline_mode=pl.Buffered(3) on this spec if DMA is
                # still exposed after row batching (re-check the v7x 64 MiB VMEM budget).
                pl.BlockSpec((Rb, sf, W), lambda r: (r, 0, 0)),
                pl.BlockSpec((W, Wo), lambda r: (0, 0)),   # B stays resident (constant index)
            ],
            # Flat (C*Ho, Wo) output slab: dense 2-D stores, sublane-aligned Rb.
            out_specs=pl.BlockSpec((Rb, Wo), lambda r: (r, 0)),
        ),
        compiler_params=pltpu.CompilerParams(
            dimension_semantics=("parallel",),
            vmem_limit_bytes=_VMEM_LIMIT_BYTES,
        ),
    )(xr, B)

    return out_flat.reshape(1, C, Ho, Wo)


# ---------------------------------------------------------------------------
# Reference (pure JAX) for a sanity check
# ---------------------------------------------------------------------------
def spadown_reference(x: jnp.ndarray, sf: int) -> jnp.ndarray:
    N, C, H, W = x.shape
    assert H % sf == 0 and W % sf == 0
    g = _gaussian_taps(sf)
    K = jnp.asarray(np.outer(g, g), jnp.float32)
    Ho, Wo = H // sf, W // sf
    xp = x.reshape(N, C, Ho, sf, Wo, sf)
    return jnp.einsum("nchuwv,uv->nchw", xp, K)


if __name__ == "__main__":
    sf = 4
    key = jax.random.PRNGKey(0)

    # Case 1: rows divide the block size exactly (C*Ho = 16).
    N, C, H, W = 1, 4, 16, 16  # batch must be 1 for this module
    x = jax.random.normal(key, (N, C, H, W), dtype=jnp.float32)

    out = jax.block_until_ready(spadown_forward(x, sf))
    ref = spadown_reference(x, sf)
    assert out.shape == (N, C, H // sf, W // sf), out.shape
    assert jnp.allclose(out, ref, atol=1e-4, rtol=1e-4), float(jnp.max(jnp.abs(out - ref)))

    # Reduced-precision path (v6e/v7x suggestion): bf16 operands, f32 accumulation.
    out_bf16 = jax.block_until_ready(spadown_forward(x, sf, compute_dtype=jnp.bfloat16))
    assert jnp.allclose(out_bf16, ref, atol=5e-2, rtol=5e-2), float(
        jnp.max(jnp.abs(out_bf16 - ref))
    )

    # Case 2: awkward row count (C*Ho = 15) -> exercises the masked partial last block.
    x2 = jax.random.normal(jax.random.PRNGKey(1), (1, 3, 20, 16), dtype=jnp.float32)
    out2 = jax.block_until_ready(spadown_forward(x2, sf))
    ref2 = spadown_reference(x2, sf)
    assert out2.shape == (1, 3, 5, 4), out2.shape
    assert jnp.allclose(out2, ref2, atol=1e-4, rtol=1e-4), float(jnp.max(jnp.abs(out2 - ref2)))

    # TODO(synk): the iscal=True branch (SpaDown_ with tanh / mean-BN / avgpool) and
    # user-supplied `predefine` kernels are outside SpaDown's default configuration
    # and are not implemented here.
    print("KERNEL_OK")
</pallas_src>

<mosaic_0001>
module attributes {stable_mosaic.version = 11 : i64} {
  func.func @kernel(%arg0: i32, %arg1: memref<8x4x16xf32, #tpu.memory_space<vmem>>, %arg2: memref<16x4xf32, #tpu.memory_space<vmem>>, %arg3: memref<8x4xf32, #tpu.memory_space<vmem>>) attributes {dimension_semantics = [#tpu.dimension_semantics<parallel>], iteration_bounds = array<i64: 2>, scalar_prefetch = 0 : i64, scratch_operands = 0 : i64, tpu.core_type = #tpu.core_type<tc>, window_params = [{transform_indices = @transform_0, window_bounds = array<i64: 8, 4, 16>}, {pipeline_mode = #tpu.pipeline_mode<synchronous>, transform_indices = @transform_1, window_bounds = array<i64: 16, 4>}, {transform_indices = @transform_2, window_bounds = array<i64: 8, 4>}]} {
    %c0 = arith.constant 0 : index
    %c0_0 = arith.constant 0 : index
    %c0_1 = arith.constant 0 : index
    %0 = vector.load %arg1[%c0, %c0_0, %c0_1] : memref<8x4x16xf32, #tpu.memory_space<vmem>>, vector<8x4x16xf32>
    %1 = vector.extract_strided_slice %0 {offsets = [0, 0, 0], sizes = [8, 1, 16], strides = [1, 1, 1]} : vector<8x4x16xf32> to vector<8x1x16xf32>
    %2 = vector.shape_cast %1 : vector<8x1x16xf32> to vector<8x16xf32>
    %cst = arith.constant 0.179898053 : f32
    %3 = vector.broadcast %cst : f32 to vector<8x16xf32>
    %4 = arith.mulf %2, %3 : vector<8x16xf32>
    %5 = vector.extract_strided_slice %0 {offsets = [0, 1, 0], sizes = [8, 1, 16], strides = [1, 1, 1]} : vector<8x4x16xf32> to vector<8x1x16xf32>
    %6 = vector.shape_cast %5 : vector<8x1x16xf32> to vector<8x16xf32>
    %cst_2 = arith.constant 0.261750132 : f32
    %7 = vector.broadcast %cst_2 : f32 to vector<8x16xf32>
    %8 = arith.mulf %6, %7 : vector<8x16xf32>
    %9 = arith.addf %4, %8 : vector<8x16xf32>
    %10 = vector.extract_strided_slice %0 {offsets = [0, 2, 0], sizes = [8, 1, 16], strides = [1, 1, 1]} : vector<8x4x16xf32> to vector<8x1x16xf32>
    %11 = vector.shape_cast %10 : vector<8x1x16xf32> to vector<8x16xf32>
    %cst_3 = arith.constant 0.296601743 : f32
    %12 = vector.broadcast %cst_3 : f32 to vector<8x16xf32>
    %13 = arith.mulf %11, %12 : vector<8x16xf32>
    %14 = arith.addf %9, %13 : vector<8x16xf32>
    %15 = vector.extract_strided_slice %0 {offsets = [0, 3, 0], sizes = [8, 1, 16], strides = [1, 1, 1]} : vector<8x4x16xf32> to vector<8x1x16xf32>
    %16 = vector.shape_cast %15 : vector<8x1x16xf32> to vector<8x16xf32>
    %cst_4 = arith.constant 0.261750132 : f32
    %17 = vector.broadcast %cst_4 : f32 to vector<8x16xf32>
    %18 = arith.mulf %16, %17 : vector<8x16xf32>
    %19 = arith.addf %14, %18 : vector<8x16xf32>
    %c0_5 = arith.constant 0 : index
    %c0_6 = arith.constant 0 : index
    %20 = vector.load %arg2[%c0_5, %c0_6] : memref<16x4xf32, #tpu.memory_space<vmem>>, vector<16x4xf32>
    %cst_7 = arith.constant dense<0.000000e+00> : vector<8x4xf32>
    %21 = tpu.matmul %19, %20, %cst_7 {dimension_numbers = #tpu.dot_dimension_numbers<[1], [0], [0], [1], [0, 0, 1, 1], [], []>} : vector<8x16xf32>, vector<16x4xf32>, vector<8x4xf32> -> vector<8x4xf32>
    %c0_8 = arith.constant 0 : index
    %c0_9 = arith.constant 0 : index
    %22 = vector.load %arg3[%c0_8, %c0_9] : memref<8x4xf32, #tpu.memory_space<vmem>>, vector<8x4xf32>
    tpu.vector_store %arg3[%c0_8, %c0_9], %21 {strides = array<i32>} : memref<8x4xf32, #tpu.memory_space<vmem>>, vector<8x4xf32>,
    return
  }
  func.func @transform_0(%arg0: i32) -> (i32, i32, i32) {
    %c0_i32 = arith.constant 0 : i32
    %c0_i32_0 = arith.constant 0 : i32
    %c0_i32_1 = arith.constant 0 : i32
    return %arg0, %c0_i32, %c0_i32_0 : i32, i32, i32
  }
  func.func @transform_1(%arg0: i32) -> (i32, i32) {
    %c0_i32 = arith.constant 0 : i32
    %c0_i32_0 = arith.constant 0 : i32
    %c0_i32_1 = arith.constant 0 : i32
    return %c0_i32, %c0_i32_0 : i32, i32
  }
  func.func @transform_2(%arg0: i32) -> (i32, i32) {
    %c0_i32 = arith.constant 0 : i32
    %c0_i32_0 = arith.constant 0 : i32
    return %arg0, %c0_i32 : i32, i32
  }
}

</mosaic_0001>

<llo_original>
// kernel: tpu_custom_call.1
$region0: #{tpu_custom_call.1}
  #allocation0 [shape = 'u32[]', space=smem, size = 0x4, offset = 0x4, fixed_abs, tag = 'smem constant byte address 0x4 - core index']
  #allocation1 [shape = 'u32[72,128]{1,0:T(1,128)}', space=vmem, size = 0x9000, scoped, tag = 'internal scratch']
  %s0 = inlined_call_operand.hbm [shape: f32[16,4,16], index: 0, kind: input, shape index: {}]
  %s1 = inlined_call_operand.vmem [shape: f32[16,4], index: 1, kind: input, shape index: {}]
  %s2 = inlined_call_operand.vmem [shape: f32[16,4], index: 2, kind: output, shape index: {}]
  %s3 = sld [smem:[#allocation0]]
  $region45: #{tpu_custom_call.1} parent=0
    _
  %s5 = ssub.s32 1, %s3
  %s6 = scalar_select 0, %s5, %s3
  $region1: #{tpu_custom_call.1} parent=0
    #allocation2 [shape = 'u8[32768]{0}', space=vmem, size = 0x8000, scoped, tag = 'input window, operand 0']
    #allocation3 [shape = 's32[2]{0}', space=sflag, size = 0x8, scoped, tag = 'scoped memory for tpu_custom_call.1']
    %7 = vsyncpa [#allocation3], 0
    %s8 = scalar_lea.sflag [#allocation3], 1
    %9 = vsyncpa %s8, 0
    loop: start=0, step=1, limit=4
    $region2: #{tpu_custom_call.1} parent=1 // loop_pre_header
      _
    $region3: #{tpu_custom_call.1} parent=1 // loop_header
      %s11 = sphi 0, %s15
      %p12 = scmp.ge.s32.totalorder %s11, 4
      %s21 = sphi 0, %s23
      %s24 = sphi 0, %s21
      %s25 = sphi 0, %s24
      %s41 = sphi 0, %s25
      %s45 = sphi 0, %s45
      %s47 = sphi 0, %s45
      %s48 = sphi 0, %s47
      %s62 = sphi 0, %s48
      %s68 = sphi 0, %s70
      %s71 = sphi 0, %s68
      %s72 = sphi 0, %s71
      %s88 = sphi 0, %s72
    $region4: #{tpu_custom_call.1} parent=1 // loop_header_branch
      %14 = sbr.rel (%p12) target = $region8
    $region5: #{tpu_custom_call.1} parent=1 // loop_body
      %s16 = ssub.s32 %s11, 1
      %s17 = ssub.s32 %s11, 2
      %s18 = sadd.s32 %s11, 1
      %s19 = ssub.s32 %s11, %s18
      %p20 = scmp.eq.s32.totalorder %s19, 0
      %s22 = sadd.s32 %s21, 1
      %s23 = scalar_select %p20, %s21, %s22
      %p26 = pneg %p20
      %p27 = scmp.eq.s32.totalorder %s11, 1
      %p28 = por %p26, %p27
      %p29 = scmp.ne.s32.totalorder %s21, %s24
      %p30 = scmp.eq.s32.totalorder %s11, 0
      %p31 = por %p29, %p30
      %p32 = scmp.ne.s32.totalorder %s21, %s24
      %p33 = scmp.eq.s32.totalorder %s16, 1
      %p34 = por %p32, %p33
      %p35 = scmp.ne.s32.totalorder %s24, %s25
      %p36 = scmp.eq.s32.totalorder %s16, 0
      %p37 = por %p35, %p36
      %p38 = scmp.ne.s32.totalorder %s24, %s25
      %p39 = scmp.eq.s32.totalorder %s17, 1
      %p40 = por %p38, %p39
      %p42 = scmp.ne.s32.totalorder %s25, %s41
      %p43 = scmp.eq.s32.totalorder %s17, 0
      %p44 = por %p42, %p43
      %s46 = sadd.s32 %s45, 1
      %p49 = scmp.eq.s32.totalorder %s11, 1
      %p50 = scmp.ne.s32.totalorder %s45, %s47
      %p51 = scmp.eq.s32.totalorder %s11, 0
      %p52 = por %p50, %p51
      %p53 = scmp.ne.s32.totalorder %s45, %s47
      %p54 = scmp.eq.s32.totalorder %s16, 1
      %p55 = por %p53, %p54
      %p56 = scmp.ne.s32.totalorder %s47, %s48
      %p57 = scmp.eq.s32.totalorder %s16, 0
      %p58 = por %p56, %p57
      %p59 = scmp.ne.s32.totalorder %s47, %s48
      %p60 = scmp.eq.s32.totalorder %s17, 1
      %p61 = por %p59, %p60
      %p63 = scmp.ne.s32.totalorder %s48, %s62
      %p64 = scmp.eq.s32.totalorder %s17, 0
      %p65 = por %p63, %p64
      %s66 = ssub.s32 %s11, %s18
      %p67 = scmp.eq.s32.totalorder %s66, 0
      %s69 = sadd.s32 %s68, 1
      %s70 = scalar_select %p67, %s68, %s69
      %p73 = pneg %p67
      %p74 = scmp.eq.s32.totalorder %s11, 1
      %p75 = por %p73, %p74
      %p76 = scmp.ne.s32.totalorder %s68, %s71
      %p77 = scmp.eq.s32.totalorder %s11, 0
      %p78 = por %p76, %p77
      %p79 = scmp.ne.s32.totalorder %s68, %s71
      %p80 = scmp.eq.s32.totalorder %s16, 1
      %p81 = por %p79, %p80
      %p82 = scmp.ne.s32.totalorder %s71, %s72
      %p83 = scmp.eq.s32.totalorder %s16, 0
      %p84 = por %p82, %p83
      %p85 = scmp.ne.s32.totalorder %s71, %s72
      %p86 = scmp.eq.s32.totalorder %s17, 1
      %p87 = por %p85, %p86
      %p89 = scmp.ne.s32.totalorder %s72, %s88
      %p90 = scmp.eq.s32.totalorder %s17, 0
      %p91 = por %p89, %p90
      %p92 = scmp.le.s32.totalorder 1, %s11
      %p93 = scmp.lt.s32.totalorder %s11, 3
      %p94 = pnand %p92, %p93
      %p95 = pneg %p94
      // Predicated region
      $region9: #{tpu_custom_call.1} parent=5 // pred_check
        _
      $region10: #{tpu_custom_call.1} parent=5 // pred_check_branch
        %97 = sbr.rel (%p94) target = $region12
      $region11: #{tpu_custom_call.1} parent=5 // pred_region
        %s98 = ssub.s32 %s11, 1
        // Predicated region
        $region13: #{tpu_custom_call.1} parent=11 // pred_check
          %p99 = pneg %p58
        $region14: #{tpu_custom_call.1} parent=11 // pred_check_branch
          %101 = sbr.rel (%p99) target = $region16
        $region15: #{tpu_custom_call.1} parent=11 // pred_region
          _
        $region16: #{tpu_custom_call.1} parent=11 // pred_fallthru
          _
      $region12: #{tpu_custom_call.1} parent=5 // pred_fallthru
        _
      %p102 = scmp.lt.s32.totalorder %s11, 2
      // Predicated region
      $region17: #{tpu_custom_call.1} parent=5 // pred_check
        %p103 = pneg %p102
      $region18: #{tpu_custom_call.1} parent=5 // pred_check_branch
        %105 = sbr.rel (%p103) target = $region20
      $region19: #{tpu_custom_call.1} parent=5 // pred_region
        // Predicated region
        $region21: #{tpu_custom_call.1} parent=19 // pred_check
          %p106 = pneg %p31
        $region22: #{tpu_custom_call.1} parent=19 // pred_check_branch
          %108 = sbr.rel (%p106) target = $region24
        $region23: #{tpu_custom_call.1} parent=19 // pred_region
          %s109 = sand.u32 %s21, 1
          %s110 = scalar_lea.sflag [#allocation3], %s109
          %s111 = sand.u32 %s21, 1
          %s112 = smul.addr %s111, 32
          %s113 = scalar_lea.vmem [#allocation2], %s112
          %s114 = smul.u32 8, %s11
          %116 = vsyncadd %s110, 0
          %s117 = smul.addr %s114, 4
          %s118 = scalar_lea.hbm %s0, %s117
          %s119 = sshll.u32 %s118, 4
          %s120 = int_to_ptr.hbm [resolvable:$true] %s119
          %s121 = sshll.u32 %s113, 4
          %s122 = int_to_ptr.vmem [resolvable:$true] %s121
          %127 = dma.hbm_to_vmem [thread:$0]  %s120, 512, %s122, %s110, 64, 64, 4
        $region24: #{tpu_custom_call.1} parent=19 // pred_fallthru
          _
      $region20: #{tpu_custom_call.1} parent=5 // pred_fallthru
        _
      %p128 = scmp.le.s32.totalorder 1, %s11
      %p129 = scmp.lt.s32.totalorder %s11, 3
      %p130 = pnand %p128, %p129
      %p131 = pneg %p130
      // Predicated region
      $region25: #{tpu_custom_call.1} parent=5 // pred_check
        _
      $region26: #{tpu_custom_call.1} parent=5 // pred_check_branch
        %133 = sbr.rel (%p130) target = $region28
      $region27: #{tpu_custom_call.1} parent=5 // pred_region
        %s134 = ssub.s32 %s11, 1
        %s135 = sand.u32 %s24, 1
        %s136 = scalar_lea.sflag [#allocation3], %s135
        %s137 = sand.u32 %s24, 1
        %s138 = smul.addr %s137, 32
        %s139 = scalar_lea.vmem [#allocation2], %s138
        // Predicated region
        $region29: #{tpu_custom_call.1} parent=27 // pred_check
          %p140 = pneg %p37
        $region30: #{tpu_custom_call.1} parent=27 // pred_check_branch
          %142 = sbr.rel (%p140) target = $region32
        $region31: #{tpu_custom_call.1} parent=27 // pred_region
          %144 = dma.done %s136, 512
        $region32: #{tpu_custom_call.1} parent=27 // pred_fallthru
          _
        %s145 = sand.u32 %s24, 1
        %s146 = scalar_lea.sflag [#allocation3], %s145
        %s147 = sand.u32 %s24, 1
        %s148 = smul.addr %s147, 32
        %s149 = scalar_lea.vmem [#allocation2], %s148
        %p150 = pneg %p37
        %p151 = pneg %p34
        %p152 = pneg %p58
        %p153 = pneg %p55
        %p154 = pneg %p84
        %p155 = pneg %p81
        %p156 = scmp.lt.s32.totalorder %s16, 1
        %s157 = scalar_select %p156, %s16, 1
        %s158 = smul.addr %s157, 8
        %s159 = scalar_lea.vmem %s2, %s158
        %s160 = smul.u32 8, %s16
        %p161 = scmp.lt.s32.totalorder %s16, 1
        %s162 = scalar_select %p161, %s16, 1
        %s163 = smul.addr %s162, 8
        %s164 = scalar_lea.vmem %s2, %s163
        %v165 = vld [vmem:[%s139] sm:$0xf]
        %v166 = vld [vmem:[%s139 + $0x4] sm:$0xf]
        %v167 = vld [vmem:[%s139 + $0x8] sm:$0xf]
        %v168 = vld [vmem:[%s139 + $0xc] sm:$0xf]
        %v169 = vld [vmem:[%s139 + $0x10] sm:$0xf]
        %v170 = vld [vmem:[%s139 + $0x14] sm:$0xf]
        %v171 = vld [vmem:[%s139 + $0x18] sm:$0xf]
        %v172 = vld [vmem:[%s139 + $0x1c] sm:$0xf]
        %v173 = vmul.f32 %v165, 0.17989805
        %v174 = vmul.f32 %v166, 0.17989805
        %v175 = vmul.f32 %v167, 0.17989805
        %v176 = vmul.f32 %v168, 0.17989805
        %v177 = vmul.f32 %v169, 0.17989805
        %v178 = vmul.f32 %v170, 0.17989805
        %v179 = vmul.f32 %v171, 0.17989805
        %v180 = vmul.f32 %v172, 0.17989805
        %v181 = vmul.f32 %v165, 0.26175013
        %v182 = vmul.f32 %v166, 0.26175013
        %v183 = vmul.f32 %v167, 0.26175013
        %v184 = vmul.f32 %v168, 0.26175013
        %v185 = vmul.f32 %v169, 0.26175013
        %v186 = vmul.f32 %v170, 0.26175013
        %v187 = vmul.f32 %v171, 0.26175013
        %v188 = vmul.f32 %v172, 0.26175013
        %v197 = vrot.slane %v181, 1
        %v198 = vrot.slane %v182, 1
        %v199 = vrot.slane %v183, 1
        %v200 = vrot.slane %v184, 1
        %v201 = vrot.slane %v185, 1
        %v202 = vrot.slane %v186, 1
        %v203 = vrot.slane %v187, 1
        %v204 = vrot.slane %v188, 1
        %v213 = vadd.f32 %v173, %v197
        %v214 = vadd.f32 %v174, %v198
        %v215 = vadd.f32 %v175, %v199
        %v216 = vadd.f32 %v176, %v200
        %v217 = vadd.f32 %v177, %v201
        %v218 = vadd.f32 %v178, %v202
        %v219 = vadd.f32 %v179, %v203
        %v220 = vadd.f32 %v180, %v204
        %v221 = vmul.f32 %v165, 0.29660174
        %v222 = vmul.f32 %v166, 0.29660174
        %v223 = vmul.f32 %v167, 0.29660174
        %v224 = vmul.f32 %v168, 0.29660174
        %v225 = vmul.f32 %v169, 0.29660174
        %v226 = vmul.f32 %v170, 0.29660174
        %v227 = vmul.f32 %v171, 0.29660174
        %v228 = vmul.f32 %v172, 0.29660174
        %v237 = vrot.slane %v221, 2
        %v238 = vrot.slane %v222, 2
        %v239 = vrot.slane %v223, 2
        %v240 = vrot.slane %v224, 2
        %v241 = vrot.slane %v225, 2
        %v242 = vrot.slane %v226, 2
        %v243 = vrot.slane %v227, 2
        %v244 = vrot.slane %v228, 2
        %v253 = vadd.f32 %v213, %v237
        %v254 = vadd.f32 %v214, %v238
        %v255 = vadd.f32 %v215, %v239
        %v256 = vadd.f32 %v216, %v240
        %v257 = vadd.f32 %v217, %v241
        %v258 = vadd.f32 %v218, %v242
        %v259 = vadd.f32 %v219, %v243
        %v260 = vadd.f32 %v220, %v244
        %v261 = vrot.slane %v181, 3
        %v262 = vrot.slane %v182, 3
        %v263 = vrot.slane %v183, 3
        %v264 = vrot.slane %v184, 3
        %v265 = vrot.slane %v185, 3
        %v266 = vrot.slane %v186, 3
        %v267 = vrot.slane %v187, 3
        %v268 = vrot.slane %v188, 3
        %v277 = vadd.f32 %v253, %v261
        %v278 = vadd.f32 %v254, %v262
        %v279 = vadd.f32 %v255, %v263
        %v280 = vadd.f32 %v256, %v264
        %v281 = vadd.f32 %v257, %v265
        %v282 = vadd.f32 %v258, %v266
        %v283 = vadd.f32 %v259, %v267
        %v284 = vadd.f32 %v260, %v268
        %v285 = vld [vmem:[%s1] sm:$0xff]
        %v286 = vld [vmem:[%s1 + $0x8] sm:$0xff]
        %v295 = vrot.slane %v278, 7
        %vm296 = vcmask 1041409
        %v297 = vsel %vm296, %v295, %v277
        %v298 = vrot.slane %v279, 6
        %vm299 = vcmask 1042434
        %v300 = vsel %vm299, %v298, %v297
        %v301 = vrot.slane %v280, 5
        %vm302 = vcmask 1043459
        %v303 = vsel %vm302, %v301, %v300
        %v304 = vrot.slane %v281, 4
        %vm305 = vcmask 1044484
        %v306 = vsel %vm305, %v304, %v303
        %v307 = vrot.slane %v282, 3
        %vm308 = vcmask 1045509
        %v309 = vsel %vm308, %v307, %v306
        %v310 = vrot.slane %v283, 2
        %vm311 = vcmask 1046534
        %v312 = vsel %vm311, %v310, %v309
        %v313 = vrot.slane %v284, 1
        %vm314 = vcmask 1047559
        %v315 = vsel %vm314, %v313, %v312
        %vm316 = vcmask 130048
        %v317 = vsel %vm316, %v315, 0
        %319 = vmatpush.msra.mxu0 0.0
        %320 = vmatpush.msra.mxu0 0.0
        %321 = vmatpush.msra.mxu0 0.0
        %322 = vmatpush.msra.mxu0 0.0
        %323 = vmatpush.msra.mxu0 0.0
        %324 = vmatpush.msra.mxu0 0.0
        %325 = vmatpush.msra.mxu0 0.0
        %326 = vmatpush.msra.mxu0 0.0
        %327 = vmatpush.msra.mxu0 0.0
        %328 = vmatpush.msra.mxu0 0.0
        %329 = vmatpush.msra.mxu0 0.0
        %330 = vmatpush.msra.mxu0 0.0
        %331 = vmatpush.msra.mxu0 0.0
        %332 = vmatpush.msra.mxu0 0.0
        %333 = vmatpush.msra.mxu0 %v286
        %334 = vmatpush.msra.mxu0 %v285
        %335 = vmatmul.f32.gmra.mxu0 %v317
        %v336 = vpop.f32.mrf.mxu0
        %v337 = vadd.f32 0.0, %v336
        %338 = vdwg.mxu0
        %vm339 = vcmask 31744
        %340 = vst.msk [vmem:[%s164] sm:$0xff] %vm339, %v337
        %p341 = scmp.lt.s32.totalorder %s16, 1
        %s342 = scalar_select %p341, %s16, 1
        %s343 = smul.addr %s342, 8
        %s344 = scalar_lea.vmem %s2, %s343
        // Predicated region
        $region33: #{tpu_custom_call.1} parent=27 // pred_check
          %p345 = pneg %p81
        $region34: #{tpu_custom_call.1} parent=27 // pred_check_branch
          %347 = sbr.rel (%p345) target = $region36
        $region35: #{tpu_custom_call.1} parent=27 // pred_region
          _
        $region36: #{tpu_custom_call.1} parent=27 // pred_fallthru
          _
      $region28: #{tpu_custom_call.1} parent=5 // pred_fallthru
        _
      %p348 = scmp.le.s32.totalorder 2, %s11
      // Predicated region
      $region37: #{tpu_custom_call.1} parent=5 // pred_check
        %p349 = pneg %p348
      $region38: #{tpu_custom_call.1} parent=5 // pred_check_branch
        %351 = sbr.rel (%p349) target = $region40
      $region39: #{tpu_custom_call.1} parent=5 // pred_region
        %s352 = ssub.s32 %s11, 2
        // Predicated region
        $region41: #{tpu_custom_call.1} parent=39 // pred_check
          %p353 = pneg %p87
        $region42: #{tpu_custom_call.1} parent=39 // pred_check_branch
          %355 = sbr.rel (%p353) target = $region44
        $region43: #{tpu_custom_call.1} parent=39 // pred_region
          %p356 = scmp.lt.s32.totalorder %s17, 1
          %s357 = scalar_select %p356, %s17, 1
          %s358 = smul.addr %s357, 8
          %s359 = scalar_lea.vmem %s2, %s358
        $region44: #{tpu_custom_call.1} parent=39 // pred_fallthru
          _
      $region40: #{tpu_custom_call.1} parent=5 // pred_fallthru
        _
    $region6: #{tpu_custom_call.1} parent=1 // loop_footer
      %s15 = sadd.s32 1, %s11
    $region7: #{tpu_custom_call.1} parent=1 // loop_footer_branch
      %10 = sbr.rel target = $region3
    $region8: #{tpu_custom_call.1} parent=1 // loop_exit
      _
    %360 = vsyncpa [#allocation3], 1
    %s361 = scalar_lea.sflag [#allocation3], 1
    %362 = vsyncpa %s361, 1

</llo_original>
